<compile_context>
chip_gen: v7x
topology: tpu7x:2x2x1
jax: 0.10.0
libtpu: 0.0.40
codegen_flags: <defaults>
</compile_context>

<pallas_src>
import math
from functools import partial

import jax
import jax.numpy as jnp
from jax import lax
from jax.experimental import pallas as pl
from jax.experimental.pallas import tpu as pltpu


def _round_up(a, m):
    return ((a + m - 1) // m) * m


def _make_mlp_kernel(num_hidden_layers: int, compute_dtype):
    """Fused MLP kernel (transposed layout: features on sublanes, batch on lanes)."""
    assert num_hidden_layers >= 1
    cd = jnp.dtype(compute_dtype)
    cast_h = cd != jnp.dtype(jnp.float32)

    def kernel(*refs):
        # refs = (x_ref, w0, b0, w1, b1, ..., wp, bp, out_ref)
        x_ref = refs[0]
        o_ref = refs[-1]
        params = refs[1:-1]

        # x block: (batch_tile, feature_dim), read straight from HBM in its
        # storage dtype (f32); any cast rides otherwise-idle VPU slots.
        x_blk = x_ref[...]
        if x_blk.dtype != cd:
            x_blk = x_blk.astype(cd)

        # Hidden layer 0: contract the feature axis of both operands,
        # (h0, feat) x (batch, feat) -> (h0, batch).  The rhs-transposed
        # dot_general feeds the MXU without an explicit XLU transpose of x.
        w0 = params[0][...]                      # torch layout (out, in)
        b0 = params[1][...]                      # (h0, 1) f32
        z = lax.dot_general(w0, x_blk, (((1,), (1,)), ((), ())),
                            preferred_element_type=jnp.float32)
        h = jnp.maximum(z + b0, 0.0)
        if cast_h:
            h = h.astype(cd)

        # Remaining hidden layers: Linear -> relu, all lane-dense (dim, batch).
        for i in range(1, num_hidden_layers):
            w = params[2 * i][...]
            b = params[2 * i + 1][...]
            z = jnp.dot(w, h, preferred_element_type=jnp.float32) + b
            h = jnp.maximum(z, 0.0)
            if cast_h:
                h = h.astype(cd)

        # predict_layer: Linear, no activation.  Output tile is
        # (out_dim, batch_tile): lane-dense, unmasked stores.
        wp = params[-2][...]
        bp = params[-1][...]
        y = jnp.dot(wp, h, preferred_element_type=jnp.float32) + bp
        o_ref[...] = y.astype(o_ref.dtype)

    return kernel


def prepare_params(weights, biases, compute_dtype=jnp.float32):
    """One-time (hoisted) parameter preparation.

    weights: list of (out_features, in_features) arrays — torch nn.Linear
             layout — for the hidden layers followed by the predict layer.
    biases:  list of (out_features,) arrays.
    compute_dtype: matmul-input dtype.  float32 (default) is best on v5e and
             costs nothing on v6e/v7x (the kernel is x-HBM-bound); bf16 is
             available but differs from the f32 reference at ~1e-2 rel. error.
    """
    assert len(weights) == len(biases) and len(weights) >= 2
    cd = jnp.dtype(compute_dtype)
    w_ops = tuple(jnp.asarray(w, cd) for w in weights)
    # Biases stay f32 (bias-add / relu run in f32) and are stored as columns so
    # they broadcast over the lane (batch) axis of the transposed activations.
    b_ops = tuple(jnp.asarray(b, jnp.float32).reshape(-1, 1) for b in biases)
    return w_ops, b_ops


def _forward_transposed(x, w_ops, b_ops, batch_tile):
    B, feature_dim = x.shape
    num_hidden = len(w_ops) - 1
    out_dim = w_ops[-1].shape[0]
    assert w_ops[0].shape[1] == feature_dim

    kernel = _make_mlp_kernel(num_hidden, w_ops[0].dtype)

    in_specs = [pl.BlockSpec((batch_tile, feature_dim), lambda i: (i, 0))]
    operands = [x]
    for w, b in zip(w_ops, b_ops):
        # Full-array blocks with a constant index map: weights/biases stay
        # resident in VMEM across grid steps.  They total <10 KiB here, so the
        # default second pipeline buffer is immaterial (no pl.Buffered needed).
        in_specs.append(pl.BlockSpec(w.shape, lambda i: (0, 0)))
        in_specs.append(pl.BlockSpec(b.shape, lambda i: (0, 0)))
        operands.append(w)
        operands.append(b)

    # Transposed output: lane axis = batch_tile -> unmasked, lane-dense stores.
    out_spec = pl.BlockSpec((out_dim, batch_tile), lambda i: (0, i))

    flops = 2 * B * sum(int(w.shape[0]) * int(w.shape[1]) for w in w_ops)
    bytes_accessed = (
        x.size * x.dtype.itemsize
        + B * out_dim * 4
        + sum(int(w.size) * w.dtype.itemsize for w in w_ops)
        + sum(int(b.size) * 4 for b in b_ops))

    return pl.pallas_call(
        kernel,
        out_shape=jax.ShapeDtypeStruct((out_dim, B), jnp.float32),
        grid_spec=pltpu.PrefetchScalarGridSpec(
            num_scalar_prefetch=0,
            grid=(pl.cdiv(B, batch_tile),),
            in_specs=in_specs,
            out_specs=out_spec,
        ),
        compiler_params=pltpu.CompilerParams(
            dimension_semantics=("parallel",),
            vmem_limit_bytes=48 * 1024 * 1024,
        ),
        cost_estimate=pl.CostEstimate(
            flops=flops, transcendentals=0, bytes_accessed=bytes_accessed),
    )(*operands)


@partial(jax.jit, static_argnames=("batch_tile",))
def _forward_t_jit(x, w_ops, b_ops, *, batch_tile):
    return _forward_transposed(x, w_ops, b_ops, batch_tile)


@partial(jax.jit, static_argnames=("batch_tile",))
def _forward_jit(x, w_ops, b_ops, *, batch_tile):
    # Layout plumbing only: back to the module's (B, out_dim) convention.
    return _forward_transposed(x, w_ops, b_ops, batch_tile).T


def _pick_batch_tile(B, batch_tile):
    if batch_tile is None:
        if B <= 2048:
            return B            # single grid step, full-batch block
        # >= 2 grid steps (v7x has 2 TensorCores on the "parallel" batch axis),
        # capped at 8192 rows/step to keep per-step VMEM in the low tens of MiB.
        return min(8192, _round_up(pl.cdiv(B, 2), 128))
    if batch_tile != B and batch_tile % 128 != 0:
        raise ValueError("batch_tile must equal the batch size or be a "
                         "multiple of 128 (lane axis of the output block)")
    return batch_tile


def neural_network_forward_transposed(x, params, *, batch_tile=None):
    """Fused MLP forward returning (output_dim, B) — no extra HBM passes.

    Prefer this entry point when the consumer can take the transposed layout.
    """
    w_ops, b_ops = params
    return _forward_t_jit(x, w_ops, b_ops,
                          batch_tile=_pick_batch_tile(x.shape[0], batch_tile))


def neural_network_forward(x, params, *, batch_tile=None):
    """Fused MLP forward matching NeuralNetwork.forward: returns (B, output_dim).

    Costs one extra XLA transpose over the small (output_dim, B) result
    relative to neural_network_forward_transposed.
    """
    w_ops, b_ops = params
    return _forward_jit(x, w_ops, b_ops,
                        batch_tile=_pick_batch_tile(x.shape[0], batch_tile))


def init_params(key, feature_dim, hidden_dims, output_dim):
    """Deterministic init mimicking torch.nn.Linear (uniform +/- 1/sqrt(fan_in)).

    Weights are stored in torch layout (out_features, in_features)."""
    dims = [feature_dim] + list(hidden_dims) + [output_dim]
    weights, biases = [], []
    for i in range(len(dims) - 1):
        fan_in, fan_out = dims[i], dims[i + 1]
        key, kw, kb = jax.random.split(key, 3)
        bound = 1.0 / math.sqrt(fan_in)
        weights.append(jax.random.uniform(kw, (fan_out, fan_in), jnp.float32,
                                          -bound, bound))
        biases.append(jax.random.uniform(kb, (fan_out,), jnp.float32,
                                         -bound, bound))
    return weights, biases


def reference_forward(x, weights, biases):
    """Plain-JAX reference matching the PyTorch forward (relu, no BN/dropout)."""
    h = x
    for w, b in zip(weights[:-1], biases[:-1]):
        h = jnp.maximum(h @ w.T + b, 0.0)
    return h @ weights[-1].T + biases[-1]


if __name__ == "__main__":
    feature_dim = 16
    hidden_dims = [32, 32]
    output_dim = 8

    key = jax.random.PRNGKey(0)
    key, kp = jax.random.split(key)
    weights, biases = init_params(kp, feature_dim, hidden_dims, output_dim)

    # Hoisted parameter prep (done once, reused across all calls).
    params_f32 = prepare_params(weights, biases)                        # default f32
    params_bf16 = prepare_params(weights, biases, compute_dtype=jnp.bfloat16)

    # 1) Tiny batch: single grid step, full-batch block, f32.
    key, k1 = jax.random.split(key)
    x1 = jax.random.normal(k1, (8, feature_dim), jnp.float32)
    y1 = jax.block_until_ready(neural_network_forward(x1, params_f32))
    assert y1.shape == (8, output_dim)
    assert jnp.allclose(y1, reference_forward(x1, weights, biases),
                        atol=1e-4, rtol=1e-4), "f32 small-batch mismatch"

    # 2) Ragged batch with an explicit 128-multiple tile: 4 grid steps, the
    #    last block partially out of bounds (masked reads/writes, no jnp.pad).
    key, k2 = jax.random.split(key)
    x2 = jax.random.normal(k2, (1000, feature_dim), jnp.float32)
    y2 = jax.block_until_ready(
        neural_network_forward(x2, params_f32, batch_tile=256))
    assert y2.shape == (1000, output_dim)
    assert jnp.allclose(y2, reference_forward(x2, weights, biases),
                        atol=1e-3, rtol=1e-3), "f32 ragged-batch mismatch"

    # 3) Default large-tile path: 2 "parallel" grid steps of 2048 rows; also
    #    exercise the transposed (zero-extra-pass) entry point.
    key, k3 = jax.random.split(key)
    x3 = jax.random.normal(k3, (4096, feature_dim), jnp.float32)
    y3 = jax.block_until_ready(neural_network_forward(x3, params_f32))
    y3_t = jax.block_until_ready(
        neural_network_forward_transposed(x3, params_f32))
    y3_ref = reference_forward(x3, weights, biases)
    assert y3.shape == (4096, output_dim)
    assert y3_t.shape == (output_dim, 4096)
    assert jnp.allclose(y3, y3_ref, atol=1e-3, rtol=1e-3), "f32 tiled mismatch"
    assert jnp.allclose(y3_t.T, y3), "transposed entry point mismatch"

    # 4) Optional bf16 compute path (x cast in-kernel, weights cast once).
    y4 = jax.block_until_ready(neural_network_forward(x3, params_bf16))
    assert jnp.allclose(y4, y3_ref, atol=1e-1, rtol=5e-2), "bf16 mismatch"

    # TODO(synk): batch_norm=True / dropout_rate>0 paths (non-default module
    # config) are not implemented in the kernel.
    print("KERNEL_OK")
</pallas_src>

<mosaic_0001>
module attributes {stable_mosaic.version = 11 : i64} {
  func.func @kernel(%arg0: i32, %arg1: memref<8x16xf32, #tpu.memory_space<vmem>>, %arg2: memref<32x16xf32, #tpu.memory_space<vmem>>, %arg3: memref<32x1xf32, #tpu.memory_space<vmem>>, %arg4: memref<32x32xf32, #tpu.memory_space<vmem>>, %arg5: memref<32x1xf32, #tpu.memory_space<vmem>>, %arg6: memref<8x32xf32, #tpu.memory_space<vmem>>, %arg7: memref<8x1xf32, #tpu.memory_space<vmem>>, %arg8: memref<8x8xf32, #tpu.memory_space<vmem>>) attributes {dimension_semantics = [#tpu.dimension_semantics<parallel>], iteration_bounds = array<i64: 1>, scalar_prefetch = 0 : i64, scratch_operands = 0 : i64, tpu.core_type = #tpu.core_type<tc>, window_params = [{transform_indices = @transform_0, window_bounds = array<i64: 8, 16>}, {pipeline_mode = #tpu.pipeline_mode<synchronous>, transform_indices = @transform_1, window_bounds = array<i64: 32, 16>}, {pipeline_mode = #tpu.pipeline_mode<synchronous>, transform_indices = @transform_2, window_bounds = array<i64: 32, 1>}, {pipeline_mode = #tpu.pipeline_mode<synchronous>, transform_indices = @transform_3, window_bounds = array<i64: 32, 32>}, {pipeline_mode = #tpu.pipeline_mode<synchronous>, transform_indices = @transform_4, window_bounds = array<i64: 32, 1>}, {pipeline_mode = #tpu.pipeline_mode<synchronous>, transform_indices = @transform_5, window_bounds = array<i64: 8, 32>}, {pipeline_mode = #tpu.pipeline_mode<synchronous>, transform_indices = @transform_6, window_bounds = array<i64: 8, 1>}, {transform_indices = @transform_7, window_bounds = array<i64: 8, 8>}]} {
    %c0 = arith.constant 0 : index
    %c0_0 = arith.constant 0 : index
    %0 = vector.load %arg1[%c0, %c0_0] : memref<8x16xf32, #tpu.memory_space<vmem>>, vector<8x16xf32>
    %c0_1 = arith.constant 0 : index
    %c0_2 = arith.constant 0 : index
    %1 = vector.load %arg2[%c0_1, %c0_2] : memref<32x16xf32, #tpu.memory_space<vmem>>, vector<32x16xf32>
    %c0_3 = arith.constant 0 : index
    %c0_4 = arith.constant 0 : index
    %2 = vector.load %arg3[%c0_3, %c0_4] : memref<32x1xf32, #tpu.memory_space<vmem>>, vector<32x1xf32>
    %cst = arith.constant dense<0.000000e+00> : vector<32x8xf32>
    %3 = tpu.matmul %1, %0, %cst {dimension_numbers = #tpu.dot_dimension_numbers<[1], [1], [0], [0], [0, 0, 1, 0], [], []>} : vector<32x16xf32>, vector<8x16xf32>, vector<32x8xf32> -> vector<32x8xf32>
    %4 = vector.broadcast %2 : vector<32x1xf32> to vector<32x8xf32>
    %5 = arith.addf %3, %4 : vector<32x8xf32>
    %cst_5 = arith.constant 0.000000e+00 : f32
    %6 = vector.broadcast %cst_5 : f32 to vector<32x8xf32>
    %7 = arith.maximumf %5, %6 : vector<32x8xf32>
    %c0_6 = arith.constant 0 : index
    %c0_7 = arith.constant 0 : index
    %8 = vector.load %arg4[%c0_6, %c0_7] : memref<32x32xf32, #tpu.memory_space<vmem>>, vector<32x32xf32>
    %c0_8 = arith.constant 0 : index
    %c0_9 = arith.constant 0 : index
    %9 = vector.load %arg5[%c0_8, %c0_9] : memref<32x1xf32, #tpu.memory_space<vmem>>, vector<32x1xf32>
    %cst_10 = arith.constant dense<0.000000e+00> : vector<32x8xf32>
    %10 = tpu.matmul %8, %7, %cst_10 {dimension_numbers = #tpu.dot_dimension_numbers<[1], [0], [0], [1], [0, 0, 1, 1], [], []>} : vector<32x32xf32>, vector<32x8xf32>, vector<32x8xf32> -> vector<32x8xf32>
    %11 = vector.broadcast %9 : vector<32x1xf32> to vector<32x8xf32>
    %12 = arith.addf %10, %11 : vector<32x8xf32>
    %cst_11 = arith.constant 0.000000e+00 : f32
    %13 = vector.broadcast %cst_11 : f32 to vector<32x8xf32>
    %14 = arith.maximumf %12, %13 : vector<32x8xf32>
    %c0_12 = arith.constant 0 : index
    %c0_13 = arith.constant 0 : index
    %15 = vector.load %arg6[%c0_12, %c0_13] : memref<8x32xf32, #tpu.memory_space<vmem>>, vector<8x32xf32>
    %c0_14 = arith.constant 0 : index
    %c0_15 = arith.constant 0 : index
    %16 = vector.load %arg7[%c0_14, %c0_15] : memref<8x1xf32, #tpu.memory_space<vmem>>, vector<8x1xf32>
    %cst_16 = arith.constant dense<0.000000e+00> : vector<8x8xf32>
    %17 = tpu.matmul %15, %14, %cst_16 {dimension_numbers = #tpu.dot_dimension_numbers<[1], [0], [0], [1], [0, 0, 1, 1], [], []>} : vector<8x32xf32>, vector<32x8xf32>, vector<8x8xf32> -> vector<8x8xf32>
    %18 = vector.broadcast %16 : vector<8x1xf32> to vector<8x8xf32>
    %19 = arith.addf %17, %18 : vector<8x8xf32>
    %c0_17 = arith.constant 0 : index
    %c0_18 = arith.constant 0 : index
    %20 = vector.load %arg8[%c0_17, %c0_18] : memref<8x8xf32, #tpu.memory_space<vmem>>, vector<8x8xf32>
    tpu.vector_store %arg8[%c0_17, %c0_18], %19 {strides = array<i32>} : memref<8x8xf32, #tpu.memory_space<vmem>>, vector<8x8xf32>,
    return
  }
  func.func @transform_0(%arg0: i32) -> (i32, i32) {
    %c0_i32 = arith.constant 0 : i32
    %c0_i32_0 = arith.constant 0 : i32
    return %arg0, %c0_i32 : i32, i32
  }
  func.func @transform_1(%arg0: i32) -> (i32, i32) {
    %c0_i32 = arith.constant 0 : i32
    %c0_i32_0 = arith.constant 0 : i32
    %c0_i32_1 = arith.constant 0 : i32
    return %c0_i32, %c0_i32_0 : i32, i32
  }
  func.func @transform_2(%arg0: i32) -> (i32, i32) {
    %c0_i32 = arith.constant 0 : i32
    %c0_i32_0 = arith.constant 0 : i32
    %c0_i32_1 = arith.constant 0 : i32
    return %c0_i32, %c0_i32_0 : i32, i32
  }
  func.func @transform_3(%arg0: i32) -> (i32, i32) {
    %c0_i32 = arith.constant 0 : i32
    %c0_i32_0 = arith.constant 0 : i32
    %c0_i32_1 = arith.constant 0 : i32
    return %c0_i32, %c0_i32_0 : i32, i32
  }
  func.func @transform_4(%arg0: i32) -> (i32, i32) {
    %c0_i32 = arith.constant 0 : i32
    %c0_i32_0 = arith.constant 0 : i32
    %c0_i32_1 = arith.constant 0 : i32
    return %c0_i32, %c0_i32_0 : i32, i32
  }
  func.func @transform_5(%arg0: i32) -> (i32, i32) {
    %c0_i32 = arith.constant 0 : i32
    %c0_i32_0 = arith.constant 0 : i32
    %c0_i32_1 = arith.constant 0 : i32
    return %c0_i32, %c0_i32_0 : i32, i32
  }
  func.func @transform_6(%arg0: i32) -> (i32, i32) {
    %c0_i32 = arith.constant 0 : i32
    %c0_i32_0 = arith.constant 0 : i32
    %c0_i32_1 = arith.constant 0 : i32
    return %c0_i32, %c0_i32_0 : i32, i32
  }
  func.func @transform_7(%arg0: i32) -> (i32, i32) {
    %c0_i32 = arith.constant 0 : i32
    %c0_i32_0 = arith.constant 0 : i32
    return %c0_i32, %arg0 : i32, i32
  }
}

</mosaic_0001>

<llo_original>
// kernel: _forward_jit.1
$region0: #{_forward_jit.1}
  #allocation0 [shape = 'u32[]', space=smem, size = 0x4, offset = 0x4, fixed_abs, tag = 'smem constant byte address 0x4 - core index']
  #allocation1 [shape = 'u32[144,128]{1,0:T(1,128)}', space=vmem, size = 0x12000, scoped, tag = 'internal scratch']
  %s0 = inlined_call_operand.vmem [shape: f32[8,16], index: 0, kind: input, shape index: {}]
  %s1 = inlined_call_operand.vmem [shape: f32[32,16], index: 1, kind: input, shape index: {}]
  %s2 = inlined_call_operand.vmem [shape: f32[32,1], index: 2, kind: input, shape index: {}]
  %s3 = inlined_call_operand.vmem [shape: f32[32,32], index: 3, kind: input, shape index: {}]
  %s4 = inlined_call_operand.vmem [shape: f32[32,1], index: 4, kind: input, shape index: {}]
  %s5 = inlined_call_operand.vmem [shape: f32[8,32], index: 5, kind: input, shape index: {}]
  %s6 = inlined_call_operand.vmem [shape: f32[8,1], index: 6, kind: input, shape index: {}]
  %s7 = inlined_call_operand.vmem [shape: f32[8,8], index: 7, kind: output, shape index: {}]
  %s8 = sld [smem:[#allocation0]]
  $region38: #{_forward_jit.1} parent=0
    _
  %s10 = ssub.s32 1, %s8
  %s11 = scalar_select 0, %s10, %s8
  // Predicated region
  $region2: #{_forward_jit.1} parent=0 // pred_check
    _
  $region3: #{_forward_jit.1} parent=0 // pred_check_branch
    %13 = sbr.rel (0) target = $region5
  $region4: #{_forward_jit.1} parent=0 // pred_region
    _
  $region5: #{_forward_jit.1} parent=0 // pred_fallthru
    _
  // Predicated region
  $region6: #{_forward_jit.1} parent=0 // pred_check
    _
  $region7: #{_forward_jit.1} parent=0 // pred_check_branch
    %15 = sbr.rel (0) target = $region9
  $region8: #{_forward_jit.1} parent=0 // pred_region
    _
  $region9: #{_forward_jit.1} parent=0 // pred_fallthru
    _
  // Predicated region
  $region10: #{_forward_jit.1} parent=0 // pred_check
    _
  $region11: #{_forward_jit.1} parent=0 // pred_check_branch
    %17 = sbr.rel (0) target = $region13
  $region12: #{_forward_jit.1} parent=0 // pred_region
    _
  $region13: #{_forward_jit.1} parent=0 // pred_fallthru
    _
  // Predicated region
  $region14: #{_forward_jit.1} parent=0 // pred_check
    _
  $region15: #{_forward_jit.1} parent=0 // pred_check_branch
    %19 = sbr.rel (0) target = $region17
  $region16: #{_forward_jit.1} parent=0 // pred_region
    _
  $region17: #{_forward_jit.1} parent=0 // pred_fallthru
    _
  // Predicated region
  $region18: #{_forward_jit.1} parent=0 // pred_check
    _
  $region19: #{_forward_jit.1} parent=0 // pred_check_branch
    %21 = sbr.rel (0) target = $region21
  $region20: #{_forward_jit.1} parent=0 // pred_region
    _
  $region21: #{_forward_jit.1} parent=0 // pred_fallthru
    _
  // Predicated region
  $region22: #{_forward_jit.1} parent=0 // pred_check
    _
  $region23: #{_forward_jit.1} parent=0 // pred_check_branch
    %23 = sbr.rel (0) target = $region25
  $region24: #{_forward_jit.1} parent=0 // pred_region
    _
  $region25: #{_forward_jit.1} parent=0 // pred_fallthru
    _
  // Predicated region
  $region26: #{_forward_jit.1} parent=0 // pred_check
    _
  $region27: #{_forward_jit.1} parent=0 // pred_check_branch
    %25 = sbr.rel (0) target = $region29
  $region28: #{_forward_jit.1} parent=0 // pred_region
    _
  $region29: #{_forward_jit.1} parent=0 // pred_fallthru
    _
  %v26 = vld [vmem:[%s0] sm:$0xff]
  %v27 = vld [vmem:[%s1] sm:$0xff]
  %v28 = vld [vmem:[%s1 + $0x8] sm:$0xff]
  %v29 = vld [vmem:[%s1 + $0x10] sm:$0xff]
  %v30 = vld [vmem:[%s1 + $0x18] sm:$0xff]
  %v31 = vld [vmem:[%s2] sm:$0xff]
  %v32 = vld [vmem:[%s2 + $0x8] sm:$0xff]
  %v33 = vld [vmem:[%s2 + $0x10] sm:$0xff]
  %v34 = vld [vmem:[%s2 + $0x18] sm:$0xff]
  %36 = vset.pattern.permute.xlu0 0
  %37 = vperm.xlu0 %36, %v31
  %v38 = vpop.permute.xlu0 %37
  %41 = vset.pattern.permute.xlu0 0
  %42 = vperm.xlu0 %41, %v32
  %v43 = vpop.permute.xlu0 %42
  %46 = vset.pattern.permute.xlu0 0
  %47 = vperm.xlu0 %46, %v33
  %v48 = vpop.permute.xlu0 %47
  %51 = vset.pattern.permute.xlu0 0
  %52 = vperm.xlu0 %51, %v34
  %v53 = vpop.permute.xlu0 %52
  %vm55 = vcmask 130048
  %v57 = vsel %vm55, %v27, 0
  %v60 = vsel %vm55, %v28, 0
  %v63 = vsel %vm55, %v29, 0
  %v66 = vsel %vm55, %v30, 0
  %v69 = vsel %vm55, %v26, 0
  %71 = vmatprep.subr.mxu0 0.0
  %72 = vmatpush1.xpose.msra.mxu0 %v69
  %73 = vmatprep.subr.mxu0 0.0
  %74 = vmatpush1.xpose.msra.mxu0 0.0
  %75 = vmatprep.subr.mxu0 0.0
  %76 = vmatpush1.xpose.msra.mxu0 0.0
  %77 = vmatprep.subr.mxu0 0.0
  %78 = vmatpush1.xpose.msra.mxu0 0.0
  %79 = vmatprep.subr.mxu0 0.0
  %80 = vmatpush1.xpose.msra.mxu0 0.0
  %81 = vmatprep.subr.mxu0 0.0
  %82 = vmatpush1.xpose.msra.mxu0 0.0
  %83 = vmatprep.subr.mxu0 0.0
  %84 = vmatpush1.xpose.msra.mxu0 0.0
  %85 = vmatprep.subr.mxu0 0.0
  %86 = vmatpush1.xpose.msra.mxu0 0.0
  %87 = vmatprep.subr.mxu0 0.0
  %88 = vmatpush1.xpose.msra.mxu0 0.0
  %89 = vmatprep.subr.mxu0 0.0
  %90 = vmatpush1.xpose.msra.mxu0 0.0
  %91 = vmatprep.subr.mxu0 0.0
  %92 = vmatpush1.xpose.msra.mxu0 0.0
  %93 = vmatprep.subr.mxu0 0.0
  %94 = vmatpush1.xpose.msra.mxu0 0.0
  %95 = vmatprep.subr.mxu0 0.0
  %96 = vmatpush1.xpose.msra.mxu0 0.0
  %97 = vmatprep.subr.mxu0 0.0
  %98 = vmatpush1.xpose.msra.mxu0 0.0
  %99 = vmatprep.subr.mxu0 0.0
  %100 = vmatpush1.xpose.msra.mxu0 0.0
  %101 = vmatprep.subr.mxu0 0.0
  %102 = vmatpush1.xpose.msra.mxu0 0.0
  %103 = vmatprep.subr.mxu0 0.0
  %104 = vmatpush1.xpose.msra.mxu0 0.0
  %105 = vmatprep.subr.mxu0 0.0
  %106 = vmatpush1.xpose.msra.mxu0 0.0
  %107 = vmatprep.subr.mxu0 0.0
  %108 = vmatpush1.xpose.msra.mxu0 0.0
  %109 = vmatprep.subr.mxu0 0.0
  %110 = vmatpush1.xpose.msra.mxu0 0.0
  %111 = vmatprep.subr.mxu0 0.0
  %112 = vmatpush1.xpose.msra.mxu0 0.0
  %113 = vmatprep.subr.mxu0 0.0
  %114 = vmatpush1.xpose.msra.mxu0 0.0
  %115 = vmatprep.subr.mxu0 0.0
  %116 = vmatpush1.xpose.msra.mxu0 0.0
  %117 = vmatprep.subr.mxu0 0.0
  %118 = vmatpush1.xpose.msra.mxu0 0.0
  %119 = vmatprep.subr.mxu0 0.0
  %120 = vmatpush1.xpose.msra.mxu0 0.0
  %121 = vmatprep.subr.mxu0 0.0
  %122 = vmatpush1.xpose.msra.mxu0 0.0
  %123 = vmatprep.subr.mxu0 0.0
  %124 = vmatpush1.xpose.msra.mxu0 0.0
  %125 = vmatprep.subr.mxu0 0.0
  %126 = vmatpush1.xpose.msra.mxu0 0.0
  %127 = vmatprep.subr.mxu0 0.0
  %128 = vmatpush1.xpose.msra.mxu0 0.0
  %129 = vmatprep.subr.mxu0 0.0
  %130 = vmatpush1.xpose.msra.mxu0 0.0
  %131 = vmatprep.subr.mxu0 0.0
  %132 = vmatpush1.xpose.msra.mxu0 0.0
  %133 = vmatprep.subr.mxu0 0.0
  %134 = vmatpush1.xpose.msra.mxu0 0.0
  %135 = vmatprep.mubr.f32.mxu0 0.0
  %136 = vmatmul.mubr.f32.gmra.mrb[0].mxu0 %v57
  %v137 = vpop.f32.mrb[0].mxu0
  %v138 = vadd.f32 %v38, %v137
  %v139 = vpop.f32.mrb[0].mxu0
  %140 = vmatprep.mubr.f32.mxu0 0.0
  %141 = vmatmul.mubr.f32.gmra.mrb[0].mxu0 %v60
  %v142 = vpop.f32.mrb[0].mxu0
  %v143 = vadd.f32 %v43, %v142
  %v144 = vpop.f32.mrb[0].mxu0
  %145 = vmatprep.mubr.f32.mxu0 0.0
  %146 = vmatmul.mubr.f32.gmra.mrb[0].mxu0 %v63
  %v147 = vpop.f32.mrb[0].mxu0
  %v148 = vadd.f32 %v48, %v147
  %v149 = vpop.f32.mrb[0].mxu0
  %150 = vmatprep.mubr.f32.mxu0 0.0
  %151 = vmatmul.mubr.f32.gmra.mrb[0].mxu0 %v66
  %v152 = vpop.f32.mrb[0].mxu0
  %v153 = vadd.f32 %v53, %v152
  %v154 = vpop.f32.mrb[0].mxu0
  %155 = vdwg.mxu0
  %v156 = vmax.f32 %v138, 0.0
  %v157 = vmax.f32 %v143, 0.0
  %v158 = vmax.f32 %v148, 0.0
  %v159 = vmax.f32 %v153, 0.0
  %v160 = vld [vmem:[%s3] sm:$0xff]
  %v161 = vld [vmem:[%s3 + $0x8] sm:$0xff]
  %v162 = vld [vmem:[%s3 + $0x10] sm:$0xff]
  %v163 = vld [vmem:[%s3 + $0x18] sm:$0xff]
  %v164 = vld [vmem:[%s4] sm:$0xff]
  %v165 = vld [vmem:[%s4 + $0x8] sm:$0xff]
  %v166 = vld [vmem:[%s4 + $0x10] sm:$0xff]
  %v167 = vld [vmem:[%s4 + $0x18] sm:$0xff]
  %169 = vset.pattern.permute.xlu0 0
  %170 = vperm.xlu0 %169, %v164
  %v171 = vpop.permute.xlu0 %170
  %174 = vset.pattern.permute.xlu0 0
  %175 = vperm.xlu0 %174, %v165
  %v176 = vpop.permute.xlu0 %175
  %179 = vset.pattern.permute.xlu0 0
  %180 = vperm.xlu0 %179, %v166
  %v181 = vpop.permute.xlu0 %180
  %184 = vset.pattern.permute.xlu0 0
  %185 = vperm.xlu0 %184, %v167
  %v186 = vpop.permute.xlu0 %185
  %vm188 = vcmask 261120
  %v190 = vsel %vm188, %v160, 0
  %v193 = vsel %vm188, %v161, 0
  %v196 = vsel %vm188, %v162, 0
  %v199 = vsel %vm188, %v163, 0
  %201 = vmatprep.subr.mxu0 0.0
  %202 = vmatpush1.msra.mxu0 %v156
  %203 = vmatprep.subr.mxu0 0.0
  %204 = vmatpush1.msra.mxu0 %v157
  %205 = vmatprep.subr.mxu0 0.0
  %206 = vmatpush1.msra.mxu0 %v158
  %207 = vmatprep.subr.mxu0 0.0
  %208 = vmatpush1.msra.mxu0 %v159
  %209 = vmatprep.subr.mxu0 0.0
  %210 = vmatpush1.msra.mxu0 0.0
  %211 = vmatprep.subr.mxu0 0.0
  %212 = vmatpush1.msra.mxu0 0.0
  %213 = vmatprep.subr.mxu0 0.0
  %214 = vmatpush1.msra.mxu0 0.0
  %215 = vmatprep.subr.mxu0 0.0
  %216 = vmatpush1.msra.mxu0 0.0
  %217 = vmatprep.subr.mxu0 0.0
  %218 = vmatpush1.msra.mxu0 0.0
  %219 = vmatprep.subr.mxu0 0.0
  %220 = vmatpush1.msra.mxu0 0.0
  %221 = vmatprep.subr.mxu0 0.0
  %222 = vmatpush1.msra.mxu0 0.0
  %223 = vmatprep.subr.mxu0 0.0
  %224 = vmatpush1.msra.mxu0 0.0
  %225 = vmatprep.subr.mxu0 0.0
  %226 = vmatpush1.msra.mxu0 0.0
  %227 = vmatprep.subr.mxu0 0.0
  %228 = vmatpush1.msra.mxu0 0.0
  %229 = vmatprep.subr.mxu0 0.0
  %230 = vmatpush1.msra.mxu0 0.0
  %231 = vmatprep.subr.mxu0 0.0
  %232 = vmatpush1.msra.mxu0 0.0
  %233 = vmatprep.subr.mxu0 0.0
  %234 = vmatpush1.msra.mxu0 0.0
  %235 = vmatprep.subr.mxu0 0.0
  %236 = vmatpush1.msra.mxu0 0.0
  %237 = vmatprep.subr.mxu0 0.0
  %238 = vmatpush1.msra.mxu0 0.0
  %239 = vmatprep.subr.mxu0 0.0
  %240 = vmatpush1.msra.mxu0 0.0
  %241 = vmatprep.subr.mxu0 0.0
  %242 = vmatpush1.msra.mxu0 0.0
  %243 = vmatprep.subr.mxu0 0.0
  %244 = vmatpush1.msra.mxu0 0.0
  %245 = vmatprep.subr.mxu0 0.0
  %246 = vmatpush1.msra.mxu0 0.0
  %247 = vmatprep.subr.mxu0 0.0
  %248 = vmatpush1.msra.mxu0 0.0
  %249 = vmatprep.subr.mxu0 0.0
  %250 = vmatpush1.msra.mxu0 0.0
  %251 = vmatprep.subr.mxu0 0.0
  %252 = vmatpush1.msra.mxu0 0.0
  %253 = vmatprep.subr.mxu0 0.0
  %254 = vmatpush1.msra.mxu0 0.0
  %255 = vmatprep.subr.mxu0 0.0
  %256 = vmatpush1.msra.mxu0 0.0
  %257 = vmatprep.subr.mxu0 0.0
  %258 = vmatpush1.msra.mxu0 0.0
  %259 = vmatprep.subr.mxu0 0.0
  %260 = vmatpush1.msra.mxu0 0.0
  %261 = vmatprep.subr.mxu0 0.0
  %262 = vmatpush1.msra.mxu0 0.0
  %263 = vmatprep.subr.mxu0 0.0
  %264 = vmatpush1.msra.mxu0 0.0
  %265 = vmatprep.mubr.f32.mxu0 0.0
  %266 = vmatmul.mubr.f32.gmra.mrb[0].mxu0 %v190
  %v267 = vpop.f32.mrb[0].mxu0
  %v268 = vadd.f32 %v171, %v267
  %v269 = vpop.f32.mrb[0].mxu0
  %270 = vmatprep.mubr.f32.mxu0 0.0
  %271 = vmatmul.mubr.f32.gmra.mrb[0].mxu0 %v193
  %v272 = vpop.f32.mrb[0].mxu0
  %v273 = vadd.f32 %v176, %v272
  %v274 = vpop.f32.mrb[0].mxu0
  %275 = vmatprep.mubr.f32.mxu0 0.0
  %276 = vmatmul.mubr.f32.gmra.mrb[0].mxu0 %v196
  %v277 = vpop.f32.mrb[0].mxu0
  %v278 = vadd.f32 %v181, %v277
  %v279 = vpop.f32.mrb[0].mxu0
  %280 = vmatprep.mubr.f32.mxu0 0.0
  %281 = vmatmul.mubr.f32.gmra.mrb[0].mxu0 %v199
  %v282 = vpop.f32.mrb[0].mxu0
  %v283 = vadd.f32 %v186, %v282
  %v284 = vpop.f32.mrb[0].mxu0
  %285 = vdwg.mxu0
  %v286 = vmax.f32 %v268, 0.0
  %v287 = vmax.f32 %v273, 0.0
  %v288 = vmax.f32 %v278, 0.0
  %v289 = vmax.f32 %v283, 0.0
  %v290 = vld [vmem:[%s5] sm:$0xff]
  %v291 = vld [vmem:[%s6] sm:$0xff]
  %293 = vset.pattern.permute.xlu0 0
  %294 = vperm.xlu0 %293, %v291
  %v295 = vpop.permute.xlu0 %294
  %v298 = vsel %vm188, %v290, 0
  %300 = vmatprep.subr.mxu0 0.0
  %301 = vmatpush1.msra.mxu0 %v286
  %302 = vmatprep.subr.mxu0 0.0
  %303 = vmatpush1.msra.mxu0 %v287
  %304 = vmatprep.subr.mxu0 0.0
  %305 = vmatpush1.msra.mxu0 %v288
  %306 = vmatprep.subr.mxu0 0.0
  %307 = vmatpush1.msra.mxu0 %v289
  %308 = vmatprep.subr.mxu0 0.0
  %309 = vmatpush1.msra.mxu0 0.0
  %310 = vmatprep.subr.mxu0 0.0
  %311 = vmatpush1.msra.mxu0 0.0
  %312 = vmatprep.subr.mxu0 0.0
  %313 = vmatpush1.msra.mxu0 0.0
  %314 = vmatprep.subr.mxu0 0.0
  %315 = vmatpush1.msra.mxu0 0.0
  %316 = vmatprep.subr.mxu0 0.0
  %317 = vmatpush1.msra.mxu0 0.0
  %318 = vmatprep.subr.mxu0 0.0
  %319 = vmatpush1.msra.mxu0 0.0
  %320 = vmatprep.subr.mxu0 0.0
  %321 = vmatpush1.msra.mxu0 0.0
  %322 = vmatprep.subr.mxu0 0.0
  %323 = vmatpush1.msra.mxu0 0.0
  %324 = vmatprep.subr.mxu0 0.0
  %325 = vmatpush1.msra.mxu0 0.0
  %326 = vmatprep.subr.mxu0 0.0
  %327 = vmatpush1.msra.mxu0 0.0
  %328 = vmatprep.subr.mxu0 0.0
  %329 = vmatpush1.msra.mxu0 0.0
  %330 = vmatprep.subr.mxu0 0.0
  %331 = vmatpush1.msra.mxu0 0.0
  %332 = vmatprep.subr.mxu0 0.0
  %333 = vmatpush1.msra.mxu0 0.0
  %334 = vmatprep.subr.mxu0 0.0
  %335 = vmatpush1.msra.mxu0 0.0
  %336 = vmatprep.subr.mxu0 0.0
  %337 = vmatpush1.msra.mxu0 0.0
  %338 = vmatprep.subr.mxu0 0.0
  %339 = vmatpush1.msra.mxu0 0.0
  %340 = vmatprep.subr.mxu0 0.0
  %341 = vmatpush1.msra.mxu0 0.0
  %342 = vmatprep.subr.mxu0 0.0
  %343 = vmatpush1.msra.mxu0 0.0
  %344 = vmatprep.subr.mxu0 0.0
  %345 = vmatpush1.msra.mxu0 0.0
  %346 = vmatprep.subr.mxu0 0.0
  %347 = vmatpush1.msra.mxu0 0.0
  %348 = vmatprep.subr.mxu0 0.0
  %349 = vmatpush1.msra.mxu0 0.0
  %350 = vmatprep.subr.mxu0 0.0
  %351 = vmatpush1.msra.mxu0 0.0
  %352 = vmatprep.subr.mxu0 0.0
  %353 = vmatpush1.msra.mxu0 0.0
  %354 = vmatprep.subr.mxu0 0.0
  %355 = vmatpush1.msra.mxu0 0.0
  %356 = vmatprep.subr.mxu0 0.0
  %357 = vmatpush1.msra.mxu0 0.0
  %358 = vmatprep.subr.mxu0 0.0
  %359 = vmatpush1.msra.mxu0 0.0
  %360 = vmatprep.subr.mxu0 0.0
  %361 = vmatpush1.msra.mxu0 0.0
  %362 = vmatprep.subr.mxu0 0.0
  %363 = vmatpush1.msra.mxu0 0.0
  %364 = vmatprep.mubr.f32.mxu0 0.0
  %365 = vmatmul.mubr.f32.gmra.mrb[0].mxu0 %v298
  %v366 = vpop.f32.mrb[0].mxu0
  %v367 = vadd.f32 %v295, %v366
  %v368 = vpop.f32.mrb[0].mxu0
  %369 = vdwg.mxu0
  %vm370 = vcmask 64512
  %371 = vst.msk [vmem:[%s7] sm:$0xff] %vm370, %v367
  // Predicated region
  $region30: #{_forward_jit.1} parent=0 // pred_check
    _
  $region31: #{_forward_jit.1} parent=0 // pred_check_branch
    %373 = sbr.rel (0) target = $region33
  $region32: #{_forward_jit.1} parent=0 // pred_region
    _
  $region33: #{_forward_jit.1} parent=0 // pred_fallthru
    _
  // Predicated region
  $region34: #{_forward_jit.1} parent=0 // pred_check
    _
  $region35: #{_forward_jit.1} parent=0 // pred_check_branch
    %375 = sbr.rel (0) target = $region37
  $region36: #{_forward_jit.1} parent=0 // pred_region
    _
  $region37: #{_forward_jit.1} parent=0 // pred_fallthru
    _

</llo_original>
